<compile_context>
chip_gen: v5e
topology: v5e:2x2
jax: 0.10.0
libtpu: 0.0.40
codegen_flags: <defaults>
</compile_context>

<pallas_src>
import numpy as np
import jax
import jax.numpy as jnp
from jax.experimental import pallas as pl
from jax.experimental.pallas import tpu as pltpu


def _round_up(x, m):
    return (x + m - 1) // m * m


def _sum_node_kernel(seg_ref, feat_ref, out_ref, acc_ref):
    """One (graph-tile, feature-tile, node-tile) grid step of the segment sum."""
    graph_step = pl.program_id(0)
    node_step = pl.program_id(2)
    last_node_step = pl.num_programs(2) - 1

    seg = seg_ref[...]                      # (1, TN)  int32 graph id per node (lane-dense)
    feat = feat_ref[...]                    # (TN, TD) node features, input dtype
    tb = acc_ref.shape[0]
    tn = feat.shape[0]

    # One-hot membership built directly in MXU orientation [TB, TN]; padded
    # nodes carry an out-of-range segment id, so their column is all zeros.
    gid = jax.lax.broadcasted_iota(jnp.int32, (tb, tn), 0) + graph_step * tb
    onehot = (gid == seg).astype(feat.dtype)

    # MXU: [TB, TN] @ [TN, TD] -> f32 partial sums for this node tile.
    partial = jnp.dot(onehot, feat, preferred_element_type=jnp.float32)

    @pl.when(node_step == 0)
    def _():
        acc_ref[...] = partial

    @pl.when(node_step > 0)
    def _():
        acc_ref[...] += partial

    @pl.when(node_step == last_node_step)
    def _():
        out_ref[...] = acc_ref[...].astype(out_ref.dtype)


def _pick_feature_tile(d):
    # Prefer lane-dense tiles (multiple of 128, <= 512 wide) that leave at
    # least two parallel feature tiles so both v7x TensorCores get work.
    for cand in (512, 384, 256, 128):
        if d % cand == 0 and d // cand >= 2:
            return cand
    for cand in (512, 384, 256, 128):
        if d % cand == 0:
            return cand
    return d  # full (possibly non-128-multiple) feature dim: exempt from the lane rule


def sum_node_forward(feat, seg_ids, num_graphs, *, node_tile=512, graph_tile=256):
    """Equivalent of SumNode.forward: per-graph sums of node features.

    feat:       [N, D] node features (f32 or bf16, kept in input dtype).
    seg_ids:    [N] int32 graph index per node (DGL batched-graph membership).
    num_graphs: static Python int (number of graphs in the batch).
    """
    n, d = feat.shape
    out_dtype = feat.dtype

    # Node (reduction) tile: multiple of 8 sublanes; 512 fills the 256-deep MXU
    # contraction on v6e/v7x and amortizes per-grid-step overhead.
    if _round_up(n, 8) <= node_tile:
        tn = _round_up(n, 8)                 # single node tile (full padded dim)
    else:
        tn = _round_up(node_tile, 128)       # streamed tiles: keep seg row lane-aligned
    n_pad = _round_up(n, tn)

    # Graph tile: bound the one-hot / accumulator when the batch is huge.
    if num_graphs > 2 * graph_tile:
        tb = graph_tile
        b_pad = _round_up(num_graphs, tb)
    else:
        tb = num_graphs
        b_pad = num_graphs

    td = _pick_feature_tile(d)

    if n_pad != n:
        feat = jnp.pad(feat, ((0, n_pad - n), (0, 0)))
        seg_ids = jnp.pad(seg_ids, (0, n_pad - n), constant_values=b_pad)
    seg_row = seg_ids.astype(jnp.int32).reshape(1, n_pad)

    grid = (b_pad // tb, d // td, n_pad // tn)

    itemsize = jnp.dtype(feat.dtype).itemsize
    out_itemsize = jnp.dtype(out_dtype).itemsize
    need = (2 * (tn * td * itemsize + tn * 4 + tb * td * out_itemsize)
            + tb * td * 4 + 2 * tb * tn * 4)
    vmem_limit = int(min(max(need + (8 << 20), 32 << 20), 56 << 20))

    cost = pl.CostEstimate(
        flops=2 * n_pad * b_pad * d,
        transcendentals=0,
        bytes_accessed=itemsize * n_pad * d + 4 * n_pad + out_itemsize * b_pad * d)

    out = pl.pallas_call(
        _sum_node_kernel,
        out_shape=jax.ShapeDtypeStruct((b_pad, d), out_dtype),
        grid=grid,
        in_specs=[
            pl.BlockSpec((1, tn), lambda g, j, i: (0, i)),    # segment ids (lane-dense row)
            pl.BlockSpec((tn, td), lambda g, j, i: (i, j)),   # node features
        ],
        out_specs=pl.BlockSpec((tb, td), lambda g, j, i: (g, j)),
        scratch_shapes=[pltpu.VMEM((tb, td), jnp.float32)],   # resident f32 accumulator
        compiler_params=pltpu.CompilerParams(
            dimension_semantics=("parallel", "parallel", "arbitrary"),
            vmem_limit_bytes=vmem_limit),
        cost_estimate=cost,
    )(seg_row, feat)

    return out[:num_graphs] if b_pad != num_graphs else out


# ------------------------------------------------------- pure-JAX reference --

def sum_node_ref(feat, seg_ids, num_graphs):
    return jax.ops.segment_sum(feat, seg_ids, num_segments=num_graphs)


# ------------------------------------------------------------------- main ---

if __name__ == "__main__":
    # TODO(synk): DGL graph batching/unbatching has no Pallas equivalent; the
    # batched-graph structure is carried as per-node int32 segment ids plus a
    # static num_graphs.

    # --- test 1: small f32 batch (3 graphs, 5/9/10 nodes, hidden=32) ---------
    node_counts = [5, 9, 10]
    num_graphs = len(node_counts)
    hidden = 32
    seg_ids = jnp.asarray(np.repeat(np.arange(num_graphs, dtype=np.int32),
                                    np.asarray(node_counts)))
    key = jax.random.PRNGKey(0)
    feat = jax.random.normal(key, (sum(node_counts), hidden), jnp.float32)

    out = jax.block_until_ready(sum_node_forward(feat, seg_ids, num_graphs))
    ref = sum_node_ref(feat, seg_ids, num_graphs)
    assert out.shape == (num_graphs, hidden)
    # MXU f32 matmuls may use multi-pass emulation -> close, not bit-identical.
    assert jnp.allclose(out, ref, atol=1e-4, rtol=1e-4), "f32 mismatch vs reference"

    # --- test 2: bf16 features, multi-tile reduction + parallel feature tiles
    node_counts2 = [180, 220, 300, 250, 150]
    num_graphs2 = len(node_counts2)
    hidden2 = 256
    seg_ids2 = jnp.asarray(np.repeat(np.arange(num_graphs2, dtype=np.int32),
                                     np.asarray(node_counts2)))
    feat2 = jax.random.normal(jax.random.PRNGKey(1),
                              (sum(node_counts2), hidden2), jnp.float32)
    out2 = jax.block_until_ready(
        sum_node_forward(feat2.astype(jnp.bfloat16), seg_ids2, num_graphs2))
    ref2 = sum_node_ref(feat2, seg_ids2, num_graphs2)
    assert out2.dtype == jnp.bfloat16 and out2.shape == (num_graphs2, hidden2)
    assert jnp.allclose(out2.astype(jnp.float32), ref2, rtol=2e-2, atol=2e-1), \
        "bf16 mismatch vs reference"

    print("KERNEL_OK")
</pallas_src>

<mosaic_0001>
module attributes {stable_mosaic.version = 11 : i64} {
  func.func @_sum_node_kernel(%arg0: i32, %arg1: i32, %arg2: i32, %arg3: memref<1x24xi32, #tpu.memory_space<vmem>>, %arg4: memref<24x32xf32, #tpu.memory_space<vmem>>, %arg5: memref<3x32xf32, #tpu.memory_space<vmem>>, %arg6: memref<3x32xf32, #tpu.memory_space<vmem>>) attributes {dimension_semantics = [#tpu.dimension_semantics<parallel>, #tpu.dimension_semantics<parallel>, #tpu.dimension_semantics<arbitrary>], iteration_bounds = array<i64: 1, 1, 1>, scalar_prefetch = 0 : i64, scratch_operands = 1 : i64, tpu.core_type = #tpu.core_type<tc>, window_params = [{transform_indices = @transform_0, window_bounds = array<i64: 1, 24>}, {transform_indices = @transform_1, window_bounds = array<i64: 24, 32>}, {transform_indices = @transform_2, window_bounds = array<i64: 3, 32>}]} {
    %c0 = arith.constant 0 : index
    %c0_0 = arith.constant 0 : index
    %0 = vector.load %arg3[%c0, %c0_0] : memref<1x24xi32, #tpu.memory_space<vmem>>, vector<1x24xi32>
    %c0_1 = arith.constant 0 : index
    %c0_2 = arith.constant 0 : index
    %1 = vector.load %arg4[%c0_1, %c0_2] : memref<24x32xf32, #tpu.memory_space<vmem>>, vector<24x32xf32>
    %2 = tpu.iota {dimensions = array<i32: 0>} : vector<3x24xi32>
    %c3_i32 = arith.constant 3 : i32
    %3 = arith.muli %arg0, %c3_i32 : i32
    %4 = vector.broadcast %3 : i32 to vector<3x24xi32>
    %5 = arith.addi %2, %4 : vector<3x24xi32>
    %6 = vector.broadcast %0 : vector<1x24xi32> to vector<3x24xi32>
    %7 = arith.cmpi eq, %5, %6 : vector<3x24xi32>
    %8 = arith.extui %7 : vector<3x24xi1> to vector<3x24xi32>
    %9 = arith.sitofp %8 : vector<3x24xi32> to vector<3x24xf32>
    %cst = arith.constant dense<0.000000e+00> : vector<3x32xf32>
    %10 = tpu.matmul %9, %1, %cst {dimension_numbers = #tpu.dot_dimension_numbers<[1], [0], [0], [1], [0, 0, 1, 1], [], []>} : vector<3x24xf32>, vector<24x32xf32>, vector<3x32xf32> -> vector<3x32xf32>
    %c0_i32 = arith.constant 0 : i32
    %11 = arith.cmpi eq, %arg2, %c0_i32 : i32
    %12 = arith.extui %11 : i1 to i32
    %c0_i32_3 = arith.constant 0 : i32
    %13 = arith.cmpi ne, %12, %c0_i32_3 : i32
    scf.if %13 {
      %c0_8 = arith.constant 0 : index
      %c0_9 = arith.constant 0 : index
      %20 = vector.load %arg6[%c0_8, %c0_9] : memref<3x32xf32, #tpu.memory_space<vmem>>, vector<3x32xf32>
      tpu.vector_store %arg6[%c0_8, %c0_9], %10 {strides = array<i32>} : memref<3x32xf32, #tpu.memory_space<vmem>>, vector<3x32xf32>,
    } else {
    }
    %c0_i32_4 = arith.constant 0 : i32
    %14 = arith.cmpi sgt, %arg2, %c0_i32_4 : i32
    %15 = arith.extui %14 : i1 to i32
    %c0_i32_5 = arith.constant 0 : i32
    %16 = arith.cmpi ne, %15, %c0_i32_5 : i32
    scf.if %16 {
      %c0_8 = arith.constant 0 : index
      %c0_9 = arith.constant 0 : index
      %20 = vector.load %arg6[%c0_8, %c0_9] : memref<3x32xf32, #tpu.memory_space<vmem>>, vector<3x32xf32>
      %21 = arith.addf %20, %10 : vector<3x32xf32>
      %c0_10 = arith.constant 0 : index
      %c0_11 = arith.constant 0 : index
      %22 = vector.load %arg6[%c0_10, %c0_11] : memref<3x32xf32, #tpu.memory_space<vmem>>, vector<3x32xf32>
      tpu.vector_store %arg6[%c0_10, %c0_11], %21 {strides = array<i32>} : memref<3x32xf32, #tpu.memory_space<vmem>>, vector<3x32xf32>,
    } else {
    }
    %c0_i32_6 = arith.constant 0 : i32
    %17 = arith.cmpi eq, %arg2, %c0_i32_6 : i32
    %18 = arith.extui %17 : i1 to i32
    %c0_i32_7 = arith.constant 0 : i32
    %19 = arith.cmpi ne, %18, %c0_i32_7 : i32
    scf.if %19 {
      %c0_8 = arith.constant 0 : index
      %c0_9 = arith.constant 0 : index
      %20 = vector.load %arg6[%c0_8, %c0_9] : memref<3x32xf32, #tpu.memory_space<vmem>>, vector<3x32xf32>
      %c0_10 = arith.constant 0 : index
      %c0_11 = arith.constant 0 : index
      %21 = vector.load %arg5[%c0_10, %c0_11] : memref<3x32xf32, #tpu.memory_space<vmem>>, vector<3x32xf32>
      tpu.vector_store %arg5[%c0_10, %c0_11], %20 {strides = array<i32>} : memref<3x32xf32, #tpu.memory_space<vmem>>, vector<3x32xf32>,
    } else {
    }
    return
  }
  func.func @transform_0(%arg0: i32, %arg1: i32, %arg2: i32) -> (i32, i32) {
    %c0_i32 = arith.constant 0 : i32
    %c0_i32_0 = arith.constant 0 : i32
    return %c0_i32, %arg2 : i32, i32
  }
  func.func @transform_1(%arg0: i32, %arg1: i32, %arg2: i32) -> (i32, i32) {
    %c0_i32 = arith.constant 0 : i32
    return %arg2, %arg1 : i32, i32
  }
  func.func @transform_2(%arg0: i32, %arg1: i32, %arg2: i32) -> (i32, i32) {
    %c0_i32 = arith.constant 0 : i32
    return %arg0, %arg1 : i32, i32
  }
}

</mosaic_0001>

<llo_original>
// kernel: tpu_custom_call.1
$region0: #{tpu_custom_call.1}
  #allocation0 [shape = 'u32[]', space=smem, size = 0x4, offset = 0x4, fixed_abs, tag = 'smem constant byte address 0x4 - core index']
  #allocation1 [shape = 'u32[72,128]{1,0:T(1,128)}', space=vmem, size = 0x9000, scoped, tag = 'internal scratch']
  #allocation2 [shape = 'f32[3,32]{1,0:T(4,128)}', space=vmem, size = 0x800, scoped, tag = 'scratch operand']
  %s0 = inlined_call_operand.hbm [shape: s32[1,24], index: 0, kind: input, shape index: {}]
  %s1 = inlined_call_operand.hbm [shape: f32[24,32], index: 1, kind: input, shape index: {}]
  %s2 = inlined_call_operand.hbm [shape: f32[3,32], index: 2, kind: output, shape index: {}]
  %s3 = sld [smem:[#allocation0]]
  $region38: #{tpu_custom_call.1} parent=0
    _
  %s5 = ssub.s32 1, %s3
  %s6 = scalar_select 0, %s5, %s3
  $region1: #{tpu_custom_call.1} parent=0
    #allocation3 [shape = 'u8[512]{0}', space=vmem, size = 0x400, scoped, tag = 'input window, operand 0, single buffered']
    #allocation4 [shape = 's32[1]{0}', space=sflag, size = 0x4, scoped, tag = 'scoped memory for tpu_custom_call.1']
    #allocation5 [shape = 's32[1]{0}', space=sflag, size = 0x4, scoped, tag = 'scoped memory for tpu_custom_call.1']
    #allocation6 [shape = 'u8[12288]{0}', space=vmem, size = 0x3000, scoped, tag = 'input window, operand 1, single buffered']
    #allocation7 [shape = 's32[1]{0}', space=sflag, size = 0x4, scoped, tag = 'scoped memory for tpu_custom_call.1']
    #allocation8 [shape = 'u8[2048]{0}', space=vmem, size = 0x800, scoped, tag = 'output window, operand 0, single buffered']
    %7 = vsyncpa [#allocation4], 0
    %8 = vsyncpa [#allocation7], 0
    %9 = vsyncpa [#allocation5], 0
    // Predicated region
    $region2: #{tpu_custom_call.1} parent=1 // pred_check
      _
    $region3: #{tpu_custom_call.1} parent=1 // pred_check_branch
      %11 = sbr.rel (0) target = $region5
    $region4: #{tpu_custom_call.1} parent=1 // pred_region
      %13 = vsyncadd [#allocation4], 0
      %s15 = sshll.u32 %s0, 4
      %s16 = int_to_ptr.hbm [resolvable:$true] %s15
      %s17 = sshll.u32 [#allocation3], 4
      %s18 = int_to_ptr.vmem [resolvable:$true] %s17
      %20 = dma.hbm_to_vmem [thread:$0]  %s16, 16, %s18, [#allocation4]
    $region5: #{tpu_custom_call.1} parent=1 // pred_fallthru
      _
    // Predicated region
    $region6: #{tpu_custom_call.1} parent=1 // pred_check
      _
    $region7: #{tpu_custom_call.1} parent=1 // pred_check_branch
      %22 = sbr.rel (0) target = $region9
    $region8: #{tpu_custom_call.1} parent=1 // pred_region
      %24 = vsyncadd [#allocation7], 0
      %s25 = sshll.u32 %s1, 4
      %s26 = int_to_ptr.hbm [resolvable:$true] %s25
      %s27 = sshll.u32 [#allocation6], 4
      %s28 = int_to_ptr.vmem [resolvable:$true] %s27
      %33 = dma.hbm_to_vmem [thread:$0]  %s26, 384, %s28, [#allocation7], 128, 128, 8
    $region9: #{tpu_custom_call.1} parent=1 // pred_fallthru
      _
    // Predicated region
    $region10: #{tpu_custom_call.1} parent=1 // pred_check
      _
    $region11: #{tpu_custom_call.1} parent=1 // pred_check_branch
      %35 = sbr.rel (0) target = $region13
    $region12: #{tpu_custom_call.1} parent=1 // pred_region
      %37 = dma.done [#allocation4], 16
    $region13: #{tpu_custom_call.1} parent=1 // pred_fallthru
      _
    // Predicated region
    $region14: #{tpu_custom_call.1} parent=1 // pred_check
      _
    $region15: #{tpu_custom_call.1} parent=1 // pred_check_branch
      %39 = sbr.rel (0) target = $region17
    $region16: #{tpu_custom_call.1} parent=1 // pred_region
      %41 = dma.done [#allocation7], 384
    $region17: #{tpu_custom_call.1} parent=1 // pred_fallthru
      _
    %v42 = vld [vmem:[#allocation3] sm:$0x1]
    %v43 = vld [vmem:[#allocation6] sm:$0xff]
    %v44 = vld [vmem:[#allocation6 + $0x8] sm:$0xff]
    %v45 = vld [vmem:[#allocation6 + $0x10] sm:$0xff]
    %v46 = vlaneseq
    %v47 = vshrl.u32 %v46, 7
    %s48 = smul.u32 0, 3
    %v49 = vstv %s48
    %v50 = vadd.s32 %v47, %v49
    %v51 = vperm.slane %v42, 0
    %vm52 = vcmp.eq.s32.totalorder %v50, %v51
    %v53 = vsel %vm52, 1, 0
    %v54 = vcvt.s32.f32 %v53
    %vm55 = vcmask 195584
    %v57 = vsel %vm55, %v54, 0
    %59 = vmatpush.msra.mxu0 0.0
    %60 = vmatpush.msra.mxu0 0.0
    %61 = vmatpush.msra.mxu0 0.0
    %62 = vmatpush.msra.mxu0 0.0
    %63 = vmatpush.msra.mxu0 0.0
    %64 = vmatpush.msra.mxu0 0.0
    %65 = vmatpush.msra.mxu0 0.0
    %66 = vmatpush.msra.mxu0 0.0
    %67 = vmatpush.msra.mxu0 0.0
    %68 = vmatpush.msra.mxu0 0.0
    %69 = vmatpush.msra.mxu0 0.0
    %70 = vmatpush.msra.mxu0 0.0
    %71 = vmatpush.msra.mxu0 0.0
    %72 = vmatpush.msra.mxu0 %v45
    %73 = vmatpush.msra.mxu0 %v44
    %74 = vmatpush.msra.mxu0 %v43
    %75 = vmatmul.f32.gmra.mxu0 %v57
    %v76 = vpop.f32.mrf.mxu0
    %v77 = vadd.f32 0.0, %v76
    %78 = vdwg.mxu0
    %p79 = scmp.eq.s32.totalorder 0, 0
    // Predicated region
    $region18: #{tpu_custom_call.1} parent=1 // pred_check
      %p80 = pneg %p79
    $region19: #{tpu_custom_call.1} parent=1 // pred_check_branch
      %82 = sbr.rel (%p80) target = $region21
    $region20: #{tpu_custom_call.1} parent=1 // pred_region
      %vm83 = vcmask 256000
      %84 = vst.msk [vmem:[#allocation2] sm:$0x7] %vm83, %v77
    $region21: #{tpu_custom_call.1} parent=1 // pred_fallthru
      _
    %p85 = scmp.gt.s32.totalorder 0, 0
    // Predicated region
    $region22: #{tpu_custom_call.1} parent=1 // pred_check
      %p86 = pneg %p85
    $region23: #{tpu_custom_call.1} parent=1 // pred_check_branch
      %88 = sbr.rel (%p86) target = $region25
    $region24: #{tpu_custom_call.1} parent=1 // pred_region
      %v89 = vld [vmem:[#allocation2] sm:$0x7]
      %v90 = vadd.f32 %v89, %v77
      %vm91 = vcmask 256000
      %92 = vst.msk [vmem:[#allocation2] sm:$0x7] %vm91, %v90
    $region25: #{tpu_custom_call.1} parent=1 // pred_fallthru
      _
    // Predicated region
    $region26: #{tpu_custom_call.1} parent=1 // pred_check
      %p93 = pneg %p79
    $region27: #{tpu_custom_call.1} parent=1 // pred_check_branch
      %95 = sbr.rel (%p93) target = $region29
    $region28: #{tpu_custom_call.1} parent=1 // pred_region
      %v96 = vld [vmem:[#allocation2] sm:$0x7]
      %vm97 = vcmask 256000
      %98 = vst.msk [vmem:[#allocation8] sm:$0x7] %vm97, %v96
    $region29: #{tpu_custom_call.1} parent=1 // pred_fallthru
      _
    // Predicated region
    $region30: #{tpu_custom_call.1} parent=1 // pred_check
      _
    $region31: #{tpu_custom_call.1} parent=1 // pred_check_branch
      %100 = sbr.rel (0) target = $region33
    $region32: #{tpu_custom_call.1} parent=1 // pred_region
      %102 = vsyncadd [#allocation5], 0
      %s104 = sshll.u32 [#allocation8], 4
      %s105 = int_to_ptr.vmem [resolvable:$true] %s104
      %s106 = sshll.u32 %s2, 4
      %s107 = int_to_ptr.hbm [resolvable:$true] %s106
      %109 = dma.vmem_to_hbm [thread:$0]  %s105, 64, %s107, [#allocation5]
    $region33: #{tpu_custom_call.1} parent=1 // pred_fallthru
      _
    // Predicated region
    $region34: #{tpu_custom_call.1} parent=1 // pred_check
      _
    $region35: #{tpu_custom_call.1} parent=1 // pred_check_branch
      %111 = sbr.rel (0) target = $region37
    $region36: #{tpu_custom_call.1} parent=1 // pred_region
      %113 = dma.done [#allocation5], 64
    $region37: #{tpu_custom_call.1} parent=1 // pred_fallthru
      _
    %114 = vsyncpa [#allocation4], 1
    %115 = vsyncpa [#allocation7], 1
    %116 = vsyncpa [#allocation5], 1

</llo_original>
